<compile_context>
chip_gen: v7x
topology: tpu7x:2x2x1
jax: 0.10.0
libtpu: 0.0.40
codegen_flags: <defaults>
</compile_context>

<pallas_src>
import functools

import jax
import jax.numpy as jnp
from jax.experimental import pallas as pl
from jax.experimental.pallas import tpu as pltpu

BLOCK_LANES = 1024      # last-dim width (multiple of 128) -> long unmasked DMAs
MAX_BLOCK_ROWS = 512    # 512 x 1024 x 4 B = 2 MiB per f32 input block
                        # (v7x could go to 1024 for a few extra %, 512 is safe
                        #  and ~85% of roofline on v5e/v6e)


def _round_up(x, m):
    return ((x + m - 1) // m) * m


def _cdiv(a, b):
    return (a + b - 1) // b


def _sublane_packing(dtype):
    # Rows per sublane group: f32 -> 8, bf16 -> 16, int8/fp8 -> 32.
    return max(8, 32 // max(1, jnp.dtype(dtype).itemsize))


def _sse_block_kernel(pred_ref, actual_ref, out_ref, *,
                      valid_rows, block_rows, mask_rows):
    """Per-block sum of squared errors of tanh(pred) - actual -> out_ref[0, 0]."""
    # Hot path: upcast (VPU) + tanh (EUP slot, free vs. the HBM bound) + sub (VPU).
    p = jnp.tanh(pred_ref[...].astype(jnp.float32))
    d = p - actual_ref[...].astype(jnp.float32)
    if mask_rows:
        # Last block hangs past the slab; Pallas pads the OOB part of the block
        # with unspecified values, so zero those rows before reducing.
        row = (jax.lax.broadcasted_iota(jnp.int32, d.shape, 0)
               + pl.program_id(0) * block_rows)
        d = jnp.where(row < valid_rows, d, 0.0)
    out_ref[0, 0] = jnp.sum(d * d)


def mean_squared_loss(predicted, actual, reduction: str = "mean"):
    """Pallas equivalent of MeanSquaredLoss.forward (tanh(predicted) then MSELoss)."""
    assert predicted.shape == actual.shape, "shape mismatch"
    n = predicted.size

    if n == 0:
        # Match torch: mean over empty is NaN, sum is 0.
        return jnp.float32(jnp.nan) if reduction == "mean" else jnp.float32(0.0)

    pf = predicted.reshape(-1)   # free reshape, keeps HBM dtype (no astype copy)
    af = actual.reshape(-1)

    rows = n // BLOCK_LANES          # full 1024-wide rows
    n_main = rows * BLOCK_LANES
    tail = n - n_main                # < 1024 leftover elements

    sse = jnp.float32(0.0)

    if rows > 0:
        packing = max(_sublane_packing(predicted.dtype),
                      _sublane_packing(actual.dtype))
        if rows <= packing:
            # Block equal to the full dim is always a legal block shape.
            block_rows = rows
        else:
            # Aim for >= 2 blocks (v7x has 2 TensorCores; the 'parallel' grid
            # axis shards across them), rounded to the dtype's sublane packing
            # and capped so a block stays ~2 MiB (f32) per input per buffer.
            block_rows = min(MAX_BLOCK_ROWS, _round_up(_cdiv(rows, 2), packing))
        num_blocks = _cdiv(rows, block_rows)
        mask_rows = (rows % block_rows) != 0

        # No padding: when tail == 0 the prefix slice is the identity and the
        # reshape is a free bitcast; when tail != 0 only the lane-divisible
        # prefix feeds the kernel and the tiny tail is reduced below.
        p2 = pf[:n_main].reshape(rows, BLOCK_LANES)
        a2 = af[:n_main].reshape(rows, BLOCK_LANES)

        kernel = functools.partial(
            _sse_block_kernel,
            valid_rows=rows, block_rows=block_rows, mask_rows=mask_rows)

        bytes_accessed = (p2.size * p2.dtype.itemsize
                          + a2.size * a2.dtype.itemsize
                          + num_blocks * 4)

        partial = pl.pallas_call(
            kernel,
            out_shape=jax.ShapeDtypeStruct((num_blocks, 1), jnp.float32),
            grid_spec=pltpu.PrefetchScalarGridSpec(
                num_scalar_prefetch=0,
                grid=(num_blocks,),
                in_specs=[
                    pl.BlockSpec((block_rows, BLOCK_LANES), lambda i: (i, 0)),
                    pl.BlockSpec((block_rows, BLOCK_LANES), lambda i: (i, 0)),
                ],
                out_specs=pl.BlockSpec(
                    (1, 1), lambda i: (i, 0), memory_space=pltpu.SMEM
                ),
            ),
            compiler_params=pltpu.CompilerParams(
                # Independent per-block partial sums -> fully parallel grid;
                # shards across both TensorCores on v7x.
                dimension_semantics=("parallel",),
                vmem_limit_bytes=32 * 1024 * 1024,
            ),
            cost_estimate=pl.CostEstimate(
                flops=3 * n_main,
                transcendentals=n_main,
                bytes_accessed=bytes_accessed,
            ),
        )(p2, a2)

        sse = sse + jnp.sum(partial)

    if tail:
        # < 1024 leftover elements: reduce with plain jnp instead of
        # materializing a padded copy of the whole tensor.
        dt = (jnp.tanh(pf[n_main:].astype(jnp.float32))
              - af[n_main:].astype(jnp.float32))
        sse = sse + jnp.sum(dt * dt)

    if reduction == "mean":
        return sse / n
    if reduction == "sum":
        return sse
    # TODO(synk): reduction='none' (elementwise output) not implemented; module default is 'mean'.
    raise NotImplementedError(f"reduction={reduction!r} not supported")


if __name__ == "__main__":
    key = jax.random.PRNGKey(0)
    k1, k2, k3, k4 = jax.random.split(key, 4)

    loss_fn = jax.jit(mean_squared_loss)

    # Small NCHW-shaped example inputs (the module is shape-agnostic).
    predicted = jax.random.normal(k1, (2, 4, 16, 16), dtype=jnp.float32)
    actual = jax.random.normal(k2, (2, 4, 16, 16), dtype=jnp.float32)
    loss = jax.block_until_ready(loss_fn(predicted, actual))
    ref = jnp.mean((jnp.tanh(predicted) - actual) ** 2)
    assert jnp.allclose(loss, ref, rtol=1e-5, atol=1e-6), (loss, ref)

    # Odd, non-1024-divisible shape: exercises the in-kernel row mask and the
    # wrapper-side lane tail (no padding anywhere).
    p_odd = jax.random.normal(k3, (52, 993), dtype=jnp.float32)
    a_odd = jax.random.normal(k4, (52, 993), dtype=jnp.float32)
    loss_odd = jax.block_until_ready(loss_fn(p_odd, a_odd))
    ref_odd = jnp.mean((jnp.tanh(p_odd) - a_odd) ** 2)
    assert jnp.allclose(loss_odd, ref_odd, rtol=1e-5, atol=1e-6), (loss_odd, ref_odd)

    print("KERNEL_OK")
</pallas_src>

<mosaic_0001>
module attributes {stable_mosaic.version = 11 : i64} {
  func.func @_sse_block_kernel(%arg0: i32, %arg1: memref<2x1024xf32, #tpu.memory_space<vmem>>, %arg2: memref<2x1024xf32, #tpu.memory_space<vmem>>, %arg3: memref<1x1xf32, #tpu.memory_space<smem>>) attributes {dimension_semantics = [#tpu.dimension_semantics<parallel>], iteration_bounds = array<i64: 1>, scalar_prefetch = 0 : i64, scratch_operands = 0 : i64, tpu.core_type = #tpu.core_type<tc>, window_params = [{transform_indices = @transform_0, window_bounds = array<i64: 2, 1024>}, {transform_indices = @transform_1, window_bounds = array<i64: 2, 1024>}, {transform_indices = @transform_2, window_bounds = array<i64: 1, 1>}]} {
    %c0 = arith.constant 0 : index
    %c0_0 = arith.constant 0 : index
    %0 = vector.load %arg1[%c0, %c0_0] : memref<2x1024xf32, #tpu.memory_space<vmem>>, vector<2x1024xf32>
    %1 = math.tanh %0 : vector<2x1024xf32>
    %c0_1 = arith.constant 0 : index
    %c0_2 = arith.constant 0 : index
    %2 = vector.load %arg2[%c0_1, %c0_2] : memref<2x1024xf32, #tpu.memory_space<vmem>>, vector<2x1024xf32>
    %3 = arith.subf %1, %2 : vector<2x1024xf32>
    %4 = arith.mulf %3, %3 : vector<2x1024xf32>
    %5 = vector.shape_cast %4 : vector<2x1024xf32> to vector<1x2x1024xf32>
    %cst = arith.constant dense<0.000000e+00> : vector<1xf32>
    %6 = vector.multi_reduction <add>, %5, %cst [1, 2] : vector<1x2x1024xf32> to vector<1xf32>
    %7 = vector.shape_cast %6 : vector<1xf32> to vector<1x1x1xf32>
    %8 = vector.extract %7[0, 0, 0] : f32 from vector<1x1x1xf32>
    %c0_3 = arith.constant 0 : index
    %c0_4 = arith.constant 0 : index
    %9 = memref.load %arg3[%c0_3, %c0_4] : memref<1x1xf32, #tpu.memory_space<smem>>
    memref.store %8, %arg3[%c0_3, %c0_4] : memref<1x1xf32, #tpu.memory_space<smem>>
    return
  }
  func.func @transform_0(%arg0: i32) -> (i32, i32) {
    %c0_i32 = arith.constant 0 : i32
    %c0_i32_0 = arith.constant 0 : i32
    return %arg0, %c0_i32 : i32, i32
  }
  func.func @transform_1(%arg0: i32) -> (i32, i32) {
    %c0_i32 = arith.constant 0 : i32
    %c0_i32_0 = arith.constant 0 : i32
    return %arg0, %c0_i32 : i32, i32
  }
  func.func @transform_2(%arg0: i32) -> (i32, i32) {
    %c0_i32 = arith.constant 0 : i32
    %c0_i32_0 = arith.constant 0 : i32
    return %arg0, %c0_i32 : i32, i32
  }
}

</mosaic_0001>

<llo_original>
// kernel: mean_squared_loss.1
$region0: #{mean_squared_loss.1}
  #allocation0 [shape = 'u32[]', space=smem, size = 0x4, offset = 0x4, fixed_abs, tag = 'smem constant byte address 0x4 - core index']
  #allocation1 [shape = 'u32[144,128]{1,0:T(1,128)}', space=vmem, size = 0x12000, scoped, tag = 'internal scratch']
  %s0 = inlined_call_operand.vmem [shape: f32[2,1024], index: 0, kind: input, shape index: {}]
  %s1 = inlined_call_operand.vmem [shape: f32[2,1024], index: 1, kind: input, shape index: {}]
  %s2 = inlined_call_operand.hbm [shape: f32[1,1], index: 2, kind: output, shape index: {}]
  %s3 = sld [smem:[#allocation0]]
  $region18: #{mean_squared_loss.1} parent=0
    _
  %s5 = ssub.s32 1, %s3
  %s6 = scalar_select 0, %s5, %s3
  $region1: #{mean_squared_loss.1} parent=0
    #allocation2 [shape = 'u8[512]{0}', space=smem, size = 0x200, scoped, tag = 'output window, operand 0, single buffered']
    #allocation3 [shape = 's32[1]{0}', space=sflag, size = 0x4, scoped, tag = 'scoped memory for mean_squared_loss.1']
    %7 = vsyncpa [#allocation3], 0
    // Predicated region
    $region2: #{mean_squared_loss.1} parent=1 // pred_check
      _
    $region3: #{mean_squared_loss.1} parent=1 // pred_check_branch
      %9 = sbr.rel (0) target = $region5
    $region4: #{mean_squared_loss.1} parent=1 // pred_region
      _
    $region5: #{mean_squared_loss.1} parent=1 // pred_fallthru
      _
    // Predicated region
    $region6: #{mean_squared_loss.1} parent=1 // pred_check
      _
    $region7: #{mean_squared_loss.1} parent=1 // pred_check_branch
      %11 = sbr.rel (0) target = $region9
    $region8: #{mean_squared_loss.1} parent=1 // pred_region
      _
    $region9: #{mean_squared_loss.1} parent=1 // pred_fallthru
      _
    %v12 = vld [vmem:[%s0] sm:$0xff]
    %v13 = vld [vmem:[%s0 + $0x8] sm:$0xff]
    %v14 = vtanh.pop %v12
    %v15 = vtanh.pop %v13
    %v16 = vld [vmem:[%s1] sm:$0xff]
    %v17 = vld [vmem:[%s1 + $0x8] sm:$0xff]
    %v18 = vsub.f32 %v14, %v16
    %v19 = vsub.f32 %v15, %v17
    %v20 = vmul.f32 %v18, %v18
    %v21 = vmul.f32 %v19, %v19
    %v24 = vcombine.high %v20, %v20
    %v26 = vunpack.c.l.s4 1983009808
    %v27 = vunpack.c.0.s8 %v26
    %v28 = vlaneseq
    %v29 = vshrl.u32 %v28, 7
    %v30 = vsub.s32 %v27, %v29
    %v31 = vrot.slane %v20, %v30
    %v33 = vunpack.c.l.s4 1983009808
    %v34 = vunpack.c.0.s8 %v33
    %v35 = vlaneseq
    %v36 = vshrl.u32 %v35, 7
    %v37 = vsub.s32 %v34, %v36
    %v38 = vrot.slane %v24, %v37
    %v39 = vcombine.high %v31, %v31
    %v40 = vcombine.high %v38, %v38
    %v41 = vcombine.high %v21, %v21
    %v43 = vunpack.c.l.s4 1983009808
    %v44 = vunpack.c.0.s8 %v43
    %v45 = vlaneseq
    %v46 = vshrl.u32 %v45, 7
    %v47 = vsub.s32 %v44, %v46
    %v48 = vrot.slane %v21, %v47
    %v50 = vunpack.c.l.s4 1983009808
    %v51 = vunpack.c.0.s8 %v50
    %v52 = vlaneseq
    %v53 = vshrl.u32 %v52, 7
    %v54 = vsub.s32 %v51, %v53
    %v55 = vrot.slane %v41, %v54
    %v56 = vcombine.high %v48, %v48
    %v57 = vcombine.high %v55, %v55
    %vm66 = vcmask 1041408
    %v67 = vsel %vm66, %v31, 0.0
    %v68 = vsel %vm66, %v39, 0.0
    %v69 = vadd.f32 %v67, %v68
    %v70 = vsel %vm66, %v38, 0.0
    %v71 = vadd.f32 %v69, %v70
    %v72 = vsel %vm66, %v40, 0.0
    %v73 = vadd.f32 %v71, %v72
    %v74 = vsel %vm66, %v48, 0.0
    %v75 = vadd.f32 %v73, %v74
    %v76 = vsel %vm66, %v56, 0.0
    %v77 = vadd.f32 %v75, %v76
    %v78 = vsel %vm66, %v55, 0.0
    %v79 = vadd.f32 %v77, %v78
    %v80 = vsel %vm66, %v57, 0.0
    %v81 = vadd.f32 %v79, %v80
    %82 = vadd.xlane.f32.xlu0 %v81
    %v83 = vpop.xlane.xlu0 %82
    %v84 = vrot.slane %v83, 4
    %v85 = vadd.f32 %v83, %v84
    %v86 = vrot.slane %v85, 2
    %v87 = vadd.f32 %v85, %v86
    %v88 = vrot.slane %v87, 1
    %v89 = vadd.f32 %v87, %v88
    %s90 = vtos %v89
    %s91 = scalar_lea.smem [#allocation2], 0
    %92 = sst [smem:[%s91]] %s90
    // Predicated region
    $region10: #{mean_squared_loss.1} parent=1 // pred_check
      _
    $region11: #{mean_squared_loss.1} parent=1 // pred_check_branch
      %94 = sbr.rel (0) target = $region13
    $region12: #{mean_squared_loss.1} parent=1 // pred_region
      %s96 = ssub.s32 16, 16
      %97 = vsyncadd [#allocation3], %s96
      %100 = dma.smem_to_hbm [#allocation2], 16, %s2, [#allocation3]
    $region13: #{mean_squared_loss.1} parent=1 // pred_fallthru
      _
    // Predicated region
    $region14: #{mean_squared_loss.1} parent=1 // pred_check
      _
    $region15: #{mean_squared_loss.1} parent=1 // pred_check_branch
      %102 = sbr.rel (0) target = $region17
    $region16: #{mean_squared_loss.1} parent=1 // pred_region
      %103 = dma.done [#allocation3], 16
    $region17: #{mean_squared_loss.1} parent=1 // pred_fallthru
      _
    %104 = sfence
    %105 = vsyncpa [#allocation3], 1

</llo_original>
